<compile_context>
chip_gen: v7x
topology: tpu7x:2x2x1
jax: 0.10.0
libtpu: 0.0.40
codegen_flags: <defaults>
</compile_context>

<pallas_src>
import jax
import jax.numpy as jnp
import numpy as np
from jax.experimental import pallas as pl
from jax.experimental.pallas import tpu as pltpu


def _mymodel_kernel(x_ref, w_ref, b_ref, p0t_ref, gsum_ref, ei_ref,
                    y_ref, e_ref, fx_ref):
    """One batch tile.

    x_ref   : (TILE_B, D)      features
    w_ref   : (D, K)           backbone weight      (resident)
    b_ref   : (1, K)           backbone bias        (resident)
    p0t_ref : (K, M*K)         softmaxed, transposed P0: p0t[j, m*K+k]=P0n[m,k,j]
    gsum_ref: (M*K, M*K)       group-sum matrix (1 where same annotator m)
    ei_ref  : (TILE_B, M*K)    gathered E[i], flattened
    y_ref   : (TILE_B, M*K)    output y, flattened
    e_ref   : (TILE_B, M*K)    output e, flattened
    fx_ref  : (TILE_B, K)      output f_x
    """
    k_classes = p0t_ref.shape[0]

    # ---- backbone: f_x = softmax(X @ W + b) --------------------------------
    logits = jnp.dot(x_ref[...], w_ref[...], preferred_element_type=jnp.float32)
    logits = logits + b_ref[...]
    logits = logits - jnp.max(logits, axis=-1, keepdims=True)
    ez = jnp.exp(logits)
    fx = ez / jnp.sum(ez, axis=-1, keepdims=True)            # (TILE_B, K)
    fx_ref[...] = fx

    # ---- y[b, m*K+k] = sum_j P0n[m,k,j] * f_x[b,j]  (MXU) ------------------
    y = jnp.dot(fx, p0t_ref[...], preferred_element_type=jnp.float32)

    # ---- e = E[i] - mean_K(E[i])  via group-sum matmul ---------------------
    ei = ei_ref[...]                                         # (TILE_B, M*K)
    gsum = gsum_ref[...]                                     # (M*K, M*K)
    e_mean = jnp.dot(ei, gsum, preferred_element_type=jnp.float32) * (1.0 / k_classes)
    e = ei - e_mean
    e_ref[...] = e

    # ---- clamp + per-(b, m) renormalization over K -------------------------
    y = y + e
    y = jnp.clip(y, 1e-10, 1.0 - 1e-10)
    ysum = jnp.dot(y, gsum, preferred_element_type=jnp.float32)
    y_ref[...] = y / ysum


def mymodel_forward(X, i, W, b, P0, E, tile_b=512):
    """Pallas version of MyModel.forward. Returns (y, e, f_x)."""
    B, D = X.shape
    M, K, _ = P0.shape
    MK = M * K

    # --- batch-invariant parameter transforms (tiny, hoisted out of kernel) --
    P0n = jax.nn.softmax(P0.astype(jnp.float32), axis=1)          # (M, K, K)
    p0t = jnp.transpose(P0n, (2, 0, 1)).reshape(K, MK)            # (K, M*K)
    grp = jnp.arange(MK, dtype=jnp.int32) // K
    gsum = (grp[:, None] == grp[None, :]).astype(jnp.float32)     # (M*K, M*K)
    b2 = b.reshape(1, K).astype(jnp.float32)

    # --- per-sample gather of E (glue; see TODO at top of file) --------------
    E_i = jnp.take(E.reshape(-1, MK).astype(jnp.float32), i, axis=0)   # (B, M*K)

    # --- tiling over the batch ------------------------------------------------
    TILE_B = B if B <= tile_b else tile_b      # (tile_b is a multiple of 8)
    grid = (pl.cdiv(B, TILE_B),)

    in_specs = [
        pl.BlockSpec((TILE_B, D), lambda t: (t, 0)),   # X        (tiled)
        pl.BlockSpec((D, K),      lambda t: (0, 0)),   # W        (resident)
        pl.BlockSpec((1, K),      lambda t: (0, 0)),   # bias     (resident)
        pl.BlockSpec((K, MK),     lambda t: (0, 0)),   # p0t      (resident)
        pl.BlockSpec((MK, MK),    lambda t: (0, 0)),   # gsum     (resident)
        pl.BlockSpec((TILE_B, MK), lambda t: (t, 0)),  # E[i]     (tiled)
    ]
    out_specs = (
        pl.BlockSpec((TILE_B, MK), lambda t: (t, 0)),  # y  (lane-dense flat)
        pl.BlockSpec((TILE_B, MK), lambda t: (t, 0)),  # e  (lane-dense flat)
        pl.BlockSpec((TILE_B, K),  lambda t: (t, 0)),  # f_x
    )
    out_shape = (
        jax.ShapeDtypeStruct((B, MK), jnp.float32),
        jax.ShapeDtypeStruct((B, MK), jnp.float32),
        jax.ShapeDtypeStruct((B, K), jnp.float32),
    )

    y_flat, e_flat, fx = pl.pallas_call(
        _mymodel_kernel,
        grid=grid,
        in_specs=in_specs,
        out_specs=out_specs,
        out_shape=out_shape,
        compiler_params=pltpu.CompilerParams(
            dimension_semantics=("parallel",)),
    )(X.astype(jnp.float32), W.astype(jnp.float32), b2, p0t, gsum, E_i)

    return y_flat.reshape(B, M, K), e_flat.reshape(B, M, K), fx


def ref_forward(X, i, W, b, P0, E):
    """Plain-JAX reference (mirrors the PyTorch forward exactly)."""
    fx = jax.nn.softmax(X @ W + b, axis=-1)
    P0n = jax.nn.softmax(P0, axis=1)
    y = jnp.einsum('mkj,bj->bmk', P0n, fx)
    Ei = E[i]
    e = Ei - Ei.mean(-1, keepdims=True)
    y = y + e
    y = jnp.clip(y, 1e-10, 1.0 - 1e-10)
    y = y / y.sum(-1, keepdims=True)
    return y, e, fx


if __name__ == "__main__":
    # Small deterministic shapes consistent with the module:
    #   K classes, M annotators, N samples, B batch, D backbone features.
    B, D, K, M, N = 8, 32, 4, 3, 16

    key = jax.random.PRNGKey(0)
    kx, kw, kb = jax.random.split(key, 3)

    # Inputs
    X = jax.random.normal(kx, (B, D), dtype=jnp.float32)
    i = jnp.arange(B, dtype=jnp.int32) % N           # per-sample index into E

    # Backbone (simple linear head) parameters — deterministic.
    W = jax.random.normal(kw, (D, K), dtype=jnp.float32) * 0.1
    b = jax.random.normal(kb, (K,), dtype=jnp.float32) * 0.1

    # MyModel parameters per __init__ (init_type=1): P0 = M stacked identities,
    # E = zeros(N, M, K).
    P0 = jnp.stack([jnp.eye(K, dtype=jnp.float32) for _ in range(M)])
    E = jnp.zeros((N, M, K), dtype=jnp.float32)

    fwd = jax.jit(mymodel_forward)
    y, e, fx = jax.block_until_ready(fwd(X, i, W, b, P0, E))

    y_r, e_r, fx_r = ref_forward(X, i, W, b, P0, E)
    np.testing.assert_allclose(np.asarray(fx), np.asarray(fx_r), rtol=1e-5, atol=1e-6)
    np.testing.assert_allclose(np.asarray(e), np.asarray(e_r), rtol=1e-5, atol=1e-6)
    np.testing.assert_allclose(np.asarray(y), np.asarray(y_r), rtol=1e-5, atol=1e-6)

    print("KERNEL_OK")
</pallas_src>

<mosaic_0001>
module attributes {stable_mosaic.version = 11 : i64} {
  func.func @_mymodel_kernel(%arg0: i32, %arg1: memref<8x32xf32, #tpu.memory_space<vmem>>, %arg2: memref<32x4xf32, #tpu.memory_space<vmem>>, %arg3: memref<1x4xf32, #tpu.memory_space<vmem>>, %arg4: memref<4x12xf32, #tpu.memory_space<vmem>>, %arg5: memref<12x12xf32, #tpu.memory_space<vmem>>, %arg6: memref<8x12xf32, #tpu.memory_space<vmem>>, %arg7: memref<8x12xf32, #tpu.memory_space<vmem>>, %arg8: memref<8x12xf32, #tpu.memory_space<vmem>>, %arg9: memref<8x4xf32, #tpu.memory_space<vmem>>) attributes {dimension_semantics = [#tpu.dimension_semantics<parallel>], iteration_bounds = array<i64: 1>, scalar_prefetch = 0 : i64, scratch_operands = 0 : i64, tpu.core_type = #tpu.core_type<tc>, window_params = [{transform_indices = @transform_0, window_bounds = array<i64: 8, 32>}, {pipeline_mode = #tpu.pipeline_mode<synchronous>, transform_indices = @transform_1, window_bounds = array<i64: 32, 4>}, {pipeline_mode = #tpu.pipeline_mode<synchronous>, transform_indices = @transform_2, window_bounds = array<i64: 1, 4>}, {pipeline_mode = #tpu.pipeline_mode<synchronous>, transform_indices = @transform_3, window_bounds = array<i64: 4, 12>}, {pipeline_mode = #tpu.pipeline_mode<synchronous>, transform_indices = @transform_4, window_bounds = array<i64: 12, 12>}, {transform_indices = @transform_5, window_bounds = array<i64: 8, 12>}, {transform_indices = @transform_6, window_bounds = array<i64: 8, 12>}, {transform_indices = @transform_7, window_bounds = array<i64: 8, 12>}, {transform_indices = @transform_8, window_bounds = array<i64: 8, 4>}]} {
    %c0 = arith.constant 0 : index
    %c0_0 = arith.constant 0 : index
    %0 = vector.load %arg1[%c0, %c0_0] : memref<8x32xf32, #tpu.memory_space<vmem>>, vector<8x32xf32>
    %c0_1 = arith.constant 0 : index
    %c0_2 = arith.constant 0 : index
    %1 = vector.load %arg2[%c0_1, %c0_2] : memref<32x4xf32, #tpu.memory_space<vmem>>, vector<32x4xf32>
    %cst = arith.constant dense<0.000000e+00> : vector<8x4xf32>
    %2 = tpu.matmul %0, %1, %cst {dimension_numbers = #tpu.dot_dimension_numbers<[1], [0], [0], [1], [0, 0, 1, 1], [], []>} : vector<8x32xf32>, vector<32x4xf32>, vector<8x4xf32> -> vector<8x4xf32>
    %c0_3 = arith.constant 0 : index
    %c0_4 = arith.constant 0 : index
    %3 = vector.load %arg3[%c0_3, %c0_4] : memref<1x4xf32, #tpu.memory_space<vmem>>, vector<1x4xf32>
    %4 = vector.broadcast %3 : vector<1x4xf32> to vector<8x4xf32>
    %5 = arith.addf %2, %4 : vector<8x4xf32>
    %cst_5 = arith.constant dense<0xFF800000> : vector<8xf32>
    %6 = vector.multi_reduction <maximumf>, %5, %cst_5 [1] : vector<8x4xf32> to vector<8xf32>
    %7 = vector.shape_cast %6 : vector<8xf32> to vector<8x1xf32>
    %8 = vector.broadcast %7 : vector<8x1xf32> to vector<8x4xf32>
    %9 = arith.subf %5, %8 : vector<8x4xf32>
    %10 = math.exp %9 : vector<8x4xf32>
    %cst_6 = arith.constant dense<0.000000e+00> : vector<8xf32>
    %11 = vector.multi_reduction <add>, %10, %cst_6 [1] : vector<8x4xf32> to vector<8xf32>
    %12 = vector.shape_cast %11 : vector<8xf32> to vector<8x1xf32>
    %13 = vector.broadcast %12 : vector<8x1xf32> to vector<8x4xf32>
    %14 = arith.divf %10, %13 : vector<8x4xf32>
    %c0_7 = arith.constant 0 : index
    %c0_8 = arith.constant 0 : index
    %15 = vector.load %arg9[%c0_7, %c0_8] : memref<8x4xf32, #tpu.memory_space<vmem>>, vector<8x4xf32>
    tpu.vector_store %arg9[%c0_7, %c0_8], %14 {strides = array<i32>} : memref<8x4xf32, #tpu.memory_space<vmem>>, vector<8x4xf32>,
    %c0_9 = arith.constant 0 : index
    %c0_10 = arith.constant 0 : index
    %16 = vector.load %arg4[%c0_9, %c0_10] : memref<4x12xf32, #tpu.memory_space<vmem>>, vector<4x12xf32>
    %cst_11 = arith.constant dense<0.000000e+00> : vector<8x12xf32>
    %17 = tpu.matmul %14, %16, %cst_11 {dimension_numbers = #tpu.dot_dimension_numbers<[1], [0], [0], [1], [0, 0, 1, 1], [], []>} : vector<8x4xf32>, vector<4x12xf32>, vector<8x12xf32> -> vector<8x12xf32>
    %c0_12 = arith.constant 0 : index
    %c0_13 = arith.constant 0 : index
    %18 = vector.load %arg6[%c0_12, %c0_13] : memref<8x12xf32, #tpu.memory_space<vmem>>, vector<8x12xf32>
    %c0_14 = arith.constant 0 : index
    %c0_15 = arith.constant 0 : index
    %19 = vector.load %arg5[%c0_14, %c0_15] : memref<12x12xf32, #tpu.memory_space<vmem>>, vector<12x12xf32>
    %cst_16 = arith.constant dense<0.000000e+00> : vector<8x12xf32>
    %20 = tpu.matmul %18, %19, %cst_16 {dimension_numbers = #tpu.dot_dimension_numbers<[1], [0], [0], [1], [0, 0, 1, 1], [], []>} : vector<8x12xf32>, vector<12x12xf32>, vector<8x12xf32> -> vector<8x12xf32>
    %cst_17 = arith.constant 2.500000e-01 : f32
    %21 = vector.broadcast %cst_17 : f32 to vector<8x12xf32>
    %22 = arith.mulf %20, %21 : vector<8x12xf32>
    %23 = arith.subf %18, %22 : vector<8x12xf32>
    %c0_18 = arith.constant 0 : index
    %c0_19 = arith.constant 0 : index
    %24 = vector.load %arg8[%c0_18, %c0_19] : memref<8x12xf32, #tpu.memory_space<vmem>>, vector<8x12xf32>
    tpu.vector_store %arg8[%c0_18, %c0_19], %23 {strides = array<i32>} : memref<8x12xf32, #tpu.memory_space<vmem>>, vector<8x12xf32>,
    %25 = arith.addf %17, %23 : vector<8x12xf32>
    %cst_20 = arith.constant 1.000000e-10 : f32
    %cst_21 = arith.constant 1.000000e+00 : f32
    %26 = vector.broadcast %cst_20 : f32 to vector<8x12xf32>
    %27 = arith.maximumf %26, %25 : vector<8x12xf32>
    %28 = vector.broadcast %cst_21 : f32 to vector<8x12xf32>
    %29 = arith.minimumf %28, %27 : vector<8x12xf32>
    %cst_22 = arith.constant dense<0.000000e+00> : vector<8x12xf32>
    %30 = tpu.matmul %29, %19, %cst_22 {dimension_numbers = #tpu.dot_dimension_numbers<[1], [0], [0], [1], [0, 0, 1, 1], [], []>} : vector<8x12xf32>, vector<12x12xf32>, vector<8x12xf32> -> vector<8x12xf32>
    %31 = arith.divf %29, %30 : vector<8x12xf32>
    %c0_23 = arith.constant 0 : index
    %c0_24 = arith.constant 0 : index
    %32 = vector.load %arg7[%c0_23, %c0_24] : memref<8x12xf32, #tpu.memory_space<vmem>>, vector<8x12xf32>
    tpu.vector_store %arg7[%c0_23, %c0_24], %31 {strides = array<i32>} : memref<8x12xf32, #tpu.memory_space<vmem>>, vector<8x12xf32>,
    return
  }
  func.func @transform_0(%arg0: i32) -> (i32, i32) {
    %c0_i32 = arith.constant 0 : i32
    %c0_i32_0 = arith.constant 0 : i32
    return %arg0, %c0_i32 : i32, i32
  }
  func.func @transform_1(%arg0: i32) -> (i32, i32) {
    %c0_i32 = arith.constant 0 : i32
    %c0_i32_0 = arith.constant 0 : i32
    %c0_i32_1 = arith.constant 0 : i32
    return %c0_i32, %c0_i32_0 : i32, i32
  }
  func.func @transform_2(%arg0: i32) -> (i32, i32) {
    %c0_i32 = arith.constant 0 : i32
    %c0_i32_0 = arith.constant 0 : i32
    %c0_i32_1 = arith.constant 0 : i32
    return %c0_i32, %c0_i32_0 : i32, i32
  }
  func.func @transform_3(%arg0: i32) -> (i32, i32) {
    %c0_i32 = arith.constant 0 : i32
    %c0_i32_0 = arith.constant 0 : i32
    %c0_i32_1 = arith.constant 0 : i32
    return %c0_i32, %c0_i32_0 : i32, i32
  }
  func.func @transform_4(%arg0: i32) -> (i32, i32) {
    %c0_i32 = arith.constant 0 : i32
    %c0_i32_0 = arith.constant 0 : i32
    %c0_i32_1 = arith.constant 0 : i32
    return %c0_i32, %c0_i32_0 : i32, i32
  }
  func.func @transform_5(%arg0: i32) -> (i32, i32) {
    %c0_i32 = arith.constant 0 : i32
    %c0_i32_0 = arith.constant 0 : i32
    return %arg0, %c0_i32 : i32, i32
  }
  func.func @transform_6(%arg0: i32) -> (i32, i32) {
    %c0_i32 = arith.constant 0 : i32
    %c0_i32_0 = arith.constant 0 : i32
    return %arg0, %c0_i32 : i32, i32
  }
  func.func @transform_7(%arg0: i32) -> (i32, i32) {
    %c0_i32 = arith.constant 0 : i32
    %c0_i32_0 = arith.constant 0 : i32
    return %arg0, %c0_i32 : i32, i32
  }
  func.func @transform_8(%arg0: i32) -> (i32, i32) {
    %c0_i32 = arith.constant 0 : i32
    %c0_i32_0 = arith.constant 0 : i32
    return %arg0, %c0_i32 : i32, i32
  }
}

</mosaic_0001>

<llo_original>
// kernel: mymodel_forward.1
$region0: #{mymodel_forward.1}
  #allocation0 [shape = 'u32[]', space=smem, size = 0x4, offset = 0x4, fixed_abs, tag = 'smem constant byte address 0x4 - core index']
  #allocation1 [shape = 'u32[144,128]{1,0:T(1,128)}', space=vmem, size = 0x12000, scoped, tag = 'internal scratch']
  %s0 = inlined_call_operand.vmem [shape: f32[8,32], index: 0, kind: input, shape index: {}]
  %s1 = inlined_call_operand.vmem [shape: f32[32,4], index: 1, kind: input, shape index: {}]
  %s2 = inlined_call_operand.vmem [shape: f32[1,4], index: 2, kind: input, shape index: {}]
  %s3 = inlined_call_operand.vmem [shape: f32[4,12], index: 3, kind: input, shape index: {}]
  %s4 = inlined_call_operand.vmem [shape: f32[12,12], index: 4, kind: input, shape index: {}]
  %s5 = inlined_call_operand.vmem [shape: f32[8,12], index: 5, kind: input, shape index: {}]
  %s6 = inlined_call_operand.vmem [shape: f32[8,12], index: 6, kind: output, shape index: {0}]
  %s7 = inlined_call_operand.vmem [shape: f32[8,12], index: 7, kind: output, shape index: {1}]
  %s8 = inlined_call_operand.vmem [shape: f32[8,4], index: 8, kind: output, shape index: {2}]
  %9 = xla_tuple %s6, %s7, %s8
  %s10 = sld [smem:[#allocation0]]
  $region50: #{mymodel_forward.1} parent=0
    _
  %s12 = ssub.s32 1, %s10
  %s13 = scalar_select 0, %s12, %s10
  // Predicated region
  $region2: #{mymodel_forward.1} parent=0 // pred_check
    _
  $region3: #{mymodel_forward.1} parent=0 // pred_check_branch
    %15 = sbr.rel (0) target = $region5
  $region4: #{mymodel_forward.1} parent=0 // pred_region
    _
  $region5: #{mymodel_forward.1} parent=0 // pred_fallthru
    _
  // Predicated region
  $region6: #{mymodel_forward.1} parent=0 // pred_check
    _
  $region7: #{mymodel_forward.1} parent=0 // pred_check_branch
    %17 = sbr.rel (0) target = $region9
  $region8: #{mymodel_forward.1} parent=0 // pred_region
    _
  $region9: #{mymodel_forward.1} parent=0 // pred_fallthru
    _
  // Predicated region
  $region10: #{mymodel_forward.1} parent=0 // pred_check
    _
  $region11: #{mymodel_forward.1} parent=0 // pred_check_branch
    %19 = sbr.rel (0) target = $region13
  $region12: #{mymodel_forward.1} parent=0 // pred_region
    _
  $region13: #{mymodel_forward.1} parent=0 // pred_fallthru
    _
  // Predicated region
  $region14: #{mymodel_forward.1} parent=0 // pred_check
    _
  $region15: #{mymodel_forward.1} parent=0 // pred_check_branch
    %21 = sbr.rel (0) target = $region17
  $region16: #{mymodel_forward.1} parent=0 // pred_region
    _
  $region17: #{mymodel_forward.1} parent=0 // pred_fallthru
    _
  // Predicated region
  $region18: #{mymodel_forward.1} parent=0 // pred_check
    _
  $region19: #{mymodel_forward.1} parent=0 // pred_check_branch
    %23 = sbr.rel (0) target = $region21
  $region20: #{mymodel_forward.1} parent=0 // pred_region
    _
  $region21: #{mymodel_forward.1} parent=0 // pred_fallthru
    _
  // Predicated region
  $region22: #{mymodel_forward.1} parent=0 // pred_check
    _
  $region23: #{mymodel_forward.1} parent=0 // pred_check_branch
    %25 = sbr.rel (0) target = $region25
  $region24: #{mymodel_forward.1} parent=0 // pred_region
    _
  $region25: #{mymodel_forward.1} parent=0 // pred_fallthru
    _
  %v26 = vld [vmem:[%s0] sm:$0xff]
  %v27 = vld [vmem:[%s1] sm:$0xff]
  %v28 = vld [vmem:[%s1 + $0x8] sm:$0xff]
  %v29 = vld [vmem:[%s1 + $0x10] sm:$0xff]
  %v30 = vld [vmem:[%s1 + $0x18] sm:$0xff]
  %v31 = vld [vmem:[%s2] sm:$0x1]
  %v33 = vlaneseq
  %v34 = vshrl.u32 %v33, 7
  %v35 = vsub.s32 0, %v34
  %v36 = vrot.slane %v31, %v35
  %vm38 = vcmask 261120
  %v40 = vsel %vm38, %v26, 0
  %42 = vmatprep.subr.mxu0 0.0
  %43 = vmatpush1.msra.mxu0 %v27
  %44 = vmatprep.subr.mxu0 0.0
  %45 = vmatpush1.msra.mxu0 %v28
  %46 = vmatprep.subr.mxu0 0.0
  %47 = vmatpush1.msra.mxu0 %v29
  %48 = vmatprep.subr.mxu0 0.0
  %49 = vmatpush1.msra.mxu0 %v30
  %50 = vmatprep.subr.mxu0 0.0
  %51 = vmatpush1.msra.mxu0 0.0
  %52 = vmatprep.subr.mxu0 0.0
  %53 = vmatpush1.msra.mxu0 0.0
  %54 = vmatprep.subr.mxu0 0.0
  %55 = vmatpush1.msra.mxu0 0.0
  %56 = vmatprep.subr.mxu0 0.0
  %57 = vmatpush1.msra.mxu0 0.0
  %58 = vmatprep.subr.mxu0 0.0
  %59 = vmatpush1.msra.mxu0 0.0
  %60 = vmatprep.subr.mxu0 0.0
  %61 = vmatpush1.msra.mxu0 0.0
  %62 = vmatprep.subr.mxu0 0.0
  %63 = vmatpush1.msra.mxu0 0.0
  %64 = vmatprep.subr.mxu0 0.0
  %65 = vmatpush1.msra.mxu0 0.0
  %66 = vmatprep.subr.mxu0 0.0
  %67 = vmatpush1.msra.mxu0 0.0
  %68 = vmatprep.subr.mxu0 0.0
  %69 = vmatpush1.msra.mxu0 0.0
  %70 = vmatprep.subr.mxu0 0.0
  %71 = vmatpush1.msra.mxu0 0.0
  %72 = vmatprep.subr.mxu0 0.0
  %73 = vmatpush1.msra.mxu0 0.0
  %74 = vmatprep.subr.mxu0 0.0
  %75 = vmatpush1.msra.mxu0 0.0
  %76 = vmatprep.subr.mxu0 0.0
  %77 = vmatpush1.msra.mxu0 0.0
  %78 = vmatprep.subr.mxu0 0.0
  %79 = vmatpush1.msra.mxu0 0.0
  %80 = vmatprep.subr.mxu0 0.0
  %81 = vmatpush1.msra.mxu0 0.0
  %82 = vmatprep.subr.mxu0 0.0
  %83 = vmatpush1.msra.mxu0 0.0
  %84 = vmatprep.subr.mxu0 0.0
  %85 = vmatpush1.msra.mxu0 0.0
  %86 = vmatprep.subr.mxu0 0.0
  %87 = vmatpush1.msra.mxu0 0.0
  %88 = vmatprep.subr.mxu0 0.0
  %89 = vmatpush1.msra.mxu0 0.0
  %90 = vmatprep.subr.mxu0 0.0
  %91 = vmatpush1.msra.mxu0 0.0
  %92 = vmatprep.subr.mxu0 0.0
  %93 = vmatpush1.msra.mxu0 0.0
  %94 = vmatprep.subr.mxu0 0.0
  %95 = vmatpush1.msra.mxu0 0.0
  %96 = vmatprep.subr.mxu0 0.0
  %97 = vmatpush1.msra.mxu0 0.0
  %98 = vmatprep.subr.mxu0 0.0
  %99 = vmatpush1.msra.mxu0 0.0
  %100 = vmatprep.subr.mxu0 0.0
  %101 = vmatpush1.msra.mxu0 0.0
  %102 = vmatprep.subr.mxu0 0.0
  %103 = vmatpush1.msra.mxu0 0.0
  %104 = vmatprep.subr.mxu0 0.0
  %105 = vmatpush1.msra.mxu0 0.0
  %106 = vmatprep.mubr.f32.mxu0 0.0
  %107 = vmatmul.mubr.f32.gmra.mrb[0].mxu0 %v40
  %v108 = vpop.f32.mrb[0].mxu0
  %v109 = vadd.f32 %v36, %v108
  %v110 = vpop.f32.mrb[0].mxu0
  %111 = vdwg.mxu0
  %vm112 = vcmask 31744
  %v113 = vsel %vm112, %v109, -inf
  %114 = vmax.xlane.f32.xlu0 %v113
  %v115 = vpop.xlane.xlu0 %114
  %v116 = vsub.f32 %v109, %v115
  %v117 = vmul.f32 %v116, 1.442695
  %v118 = vpow.pop %v117
  %v119 = vsel %vm112, %v118, 0.0
  %120 = vadd.xlane.f32.xlu0 %v119
  %v121 = vpop.xlane.xlu0 %120
  %v122 = vrcp.pop %v121
  %v123 = vmul.f32 %v118, %v122
  %124 = vst.msk [vmem:[%s8] sm:$0xff] %vm112, %v123
  %v125 = vld [vmem:[%s3] sm:$0xf]
  %v126 = vld [vmem:[%s5] sm:$0xff]
  %v127 = vld [vmem:[%s4] sm:$0xff]
  %v128 = vld [vmem:[%s4 + $0x8] sm:$0xf]
  %vm129 = vcmask 97280
  %v131 = vsel %vm129, %v126, 0
  %vm133 = vcmask 1043456
  %v135 = vsel %vm133, %v128, 0
  %137 = vmatprep.subr.mxu0 0.0
  %138 = vmatpush1.msra.mxu0 %v127
  %139 = vmatprep.subr.mxu0 0.0
  %140 = vmatpush1.msra.mxu0 %v135
  %141 = vmatprep.subr.mxu0 0.0
  %142 = vmatpush1.msra.mxu0 0.0
  %143 = vmatprep.subr.mxu0 0.0
  %144 = vmatpush1.msra.mxu0 0.0
  %145 = vmatprep.subr.mxu0 0.0
  %146 = vmatpush1.msra.mxu0 0.0
  %147 = vmatprep.subr.mxu0 0.0
  %148 = vmatpush1.msra.mxu0 0.0
  %149 = vmatprep.subr.mxu0 0.0
  %150 = vmatpush1.msra.mxu0 0.0
  %151 = vmatprep.subr.mxu0 0.0
  %152 = vmatpush1.msra.mxu0 0.0
  %153 = vmatprep.subr.mxu0 0.0
  %154 = vmatpush1.msra.mxu0 0.0
  %155 = vmatprep.subr.mxu0 0.0
  %156 = vmatpush1.msra.mxu0 0.0
  %157 = vmatprep.subr.mxu0 0.0
  %158 = vmatpush1.msra.mxu0 0.0
  %159 = vmatprep.subr.mxu0 0.0
  %160 = vmatpush1.msra.mxu0 0.0
  %161 = vmatprep.subr.mxu0 0.0
  %162 = vmatpush1.msra.mxu0 0.0
  %163 = vmatprep.subr.mxu0 0.0
  %164 = vmatpush1.msra.mxu0 0.0
  %165 = vmatprep.subr.mxu0 0.0
  %166 = vmatpush1.msra.mxu0 0.0
  %167 = vmatprep.subr.mxu0 0.0
  %168 = vmatpush1.msra.mxu0 0.0
  %169 = vmatprep.subr.mxu0 0.0
  %170 = vmatpush1.msra.mxu0 0.0
  %171 = vmatprep.subr.mxu0 0.0
  %172 = vmatpush1.msra.mxu0 0.0
  %173 = vmatprep.subr.mxu0 0.0
  %174 = vmatpush1.msra.mxu0 0.0
  %175 = vmatprep.subr.mxu0 0.0
  %176 = vmatpush1.msra.mxu0 0.0
  %177 = vmatprep.subr.mxu0 0.0
  %178 = vmatpush1.msra.mxu0 0.0
  %179 = vmatprep.subr.mxu0 0.0
  %180 = vmatpush1.msra.mxu0 0.0
  %181 = vmatprep.subr.mxu0 0.0
  %182 = vmatpush1.msra.mxu0 0.0
  %183 = vmatprep.subr.mxu0 0.0
  %184 = vmatpush1.msra.mxu0 0.0
  %185 = vmatprep.subr.mxu0 0.0
  %186 = vmatpush1.msra.mxu0 0.0
  %187 = vmatprep.subr.mxu0 0.0
  %188 = vmatpush1.msra.mxu0 0.0
  %189 = vmatprep.subr.mxu0 0.0
  %190 = vmatpush1.msra.mxu0 0.0
  %191 = vmatprep.subr.mxu0 0.0
  %192 = vmatpush1.msra.mxu0 0.0
  %193 = vmatprep.subr.mxu0 0.0
  %194 = vmatpush1.msra.mxu0 0.0
  %195 = vmatprep.subr.mxu0 0.0
  %196 = vmatpush1.msra.mxu0 0.0
  %197 = vmatprep.subr.mxu0 0.0
  %198 = vmatpush1.msra.mxu0 0.0
  %199 = vmatprep.subr.mxu0 0.0
  %200 = vmatpush1.msra.mxu0 0.0
  %201 = vmatprep.mubr.f32.mxu0 0.0
  %202 = vmatmul.mubr.f32.gmra.mrb[0].mxu0 %v131
  %v203 = vpop.f32.mrb[0].mxu0
  %v204 = vadd.f32 0.0, %v203
  %v205 = vpop.f32.mrb[0].mxu0
  %206 = vdwg.mxu0
  %v207 = vmul.f32 %v204, 0.25
  %v208 = vsub.f32 %v126, %v207
  %209 = vst.msk [vmem:[%s7] sm:$0xff] %vm129, %v208
  %v211 = vsel %vm112, %v123, 0
  %v214 = vsel %vm133, %v125, 0
  %216 = vmatprep.subr.mxu0 0.0
  %217 = vmatpush1.msra.mxu0 %v214
  %218 = vmatprep.subr.mxu0 0.0
  %219 = vmatpush1.msra.mxu0 0.0
  %220 = vmatprep.subr.mxu0 0.0
  %221 = vmatpush1.msra.mxu0 0.0
  %222 = vmatprep.subr.mxu0 0.0
  %223 = vmatpush1.msra.mxu0 0.0
  %224 = vmatprep.subr.mxu0 0.0
  %225 = vmatpush1.msra.mxu0 0.0
  %226 = vmatprep.subr.mxu0 0.0
  %227 = vmatpush1.msra.mxu0 0.0
  %228 = vmatprep.subr.mxu0 0.0
  %229 = vmatpush1.msra.mxu0 0.0
  %230 = vmatprep.subr.mxu0 0.0
  %231 = vmatpush1.msra.mxu0 0.0
  %232 = vmatprep.subr.mxu0 0.0
  %233 = vmatpush1.msra.mxu0 0.0
  %234 = vmatprep.subr.mxu0 0.0
  %235 = vmatpush1.msra.mxu0 0.0
  %236 = vmatprep.subr.mxu0 0.0
  %237 = vmatpush1.msra.mxu0 0.0
  %238 = vmatprep.subr.mxu0 0.0
  %239 = vmatpush1.msra.mxu0 0.0
  %240 = vmatprep.subr.mxu0 0.0
  %241 = vmatpush1.msra.mxu0 0.0
  %242 = vmatprep.subr.mxu0 0.0
  %243 = vmatpush1.msra.mxu0 0.0
  %244 = vmatprep.subr.mxu0 0.0
  %245 = vmatpush1.msra.mxu0 0.0
  %246 = vmatprep.subr.mxu0 0.0
  %247 = vmatpush1.msra.mxu0 0.0
  %248 = vmatprep.subr.mxu0 0.0
  %249 = vmatpush1.msra.mxu0 0.0
  %250 = vmatprep.subr.mxu0 0.0
  %251 = vmatpush1.msra.mxu0 0.0
  %252 = vmatprep.subr.mxu0 0.0
  %253 = vmatpush1.msra.mxu0 0.0
  %254 = vmatprep.subr.mxu0 0.0
  %255 = vmatpush1.msra.mxu0 0.0
  %256 = vmatprep.subr.mxu0 0.0
  %257 = vmatpush1.msra.mxu0 0.0
  %258 = vmatprep.subr.mxu0 0.0
  %259 = vmatpush1.msra.mxu0 0.0
  %260 = vmatprep.subr.mxu0 0.0
  %261 = vmatpush1.msra.mxu0 0.0
  %262 = vmatprep.subr.mxu0 0.0
  %263 = vmatpush1.msra.mxu0 0.0
  %264 = vmatprep.subr.mxu0 0.0
  %265 = vmatpush1.msra.mxu0 0.0
  %266 = vmatprep.subr.mxu0 0.0
  %267 = vmatpush1.msra.mxu0 0.0
  %268 = vmatprep.subr.mxu0 0.0
  %269 = vmatpush1.msra.mxu0 0.0
  %270 = vmatprep.subr.mxu0 0.0
  %271 = vmatpush1.msra.mxu0 0.0
  %272 = vmatprep.subr.mxu0 0.0
  %273 = vmatpush1.msra.mxu0 0.0
  %274 = vmatprep.subr.mxu0 0.0
  %275 = vmatpush1.msra.mxu0 0.0
  %276 = vmatprep.subr.mxu0 0.0
  %277 = vmatpush1.msra.mxu0 0.0
  %278 = vmatprep.subr.mxu0 0.0
  %279 = vmatpush1.msra.mxu0 0.0
  %280 = vmatprep.mubr.f32.mxu0 0.0
  %281 = vmatmul.mubr.f32.gmra.mrb[0].mxu0 %v211
  %v282 = vpop.f32.mrb[0].mxu0
  %v283 = vadd.f32 %v208, %v282
  %v284 = vpop.f32.mrb[0].mxu0
  %285 = vdwg.mxu0
  %v286 = vmax.f32 %v283, 1e-10
  %v287 = vmin.f32 %v286, 1.0
  %v289 = vsel %vm129, %v287, 0
  %291 = vmatprep.subr.mxu0 0.0
  %292 = vmatpush1.msra.mxu0 %v127
  %293 = vmatprep.subr.mxu0 0.0
  %294 = vmatpush1.msra.mxu0 %v135
  %295 = vmatprep.subr.mxu0 0.0
  %296 = vmatpush1.msra.mxu0 0.0
  %297 = vmatprep.subr.mxu0 0.0
  %298 = vmatpush1.msra.mxu0 0.0
  %299 = vmatprep.subr.mxu0 0.0
  %300 = vmatpush1.msra.mxu0 0.0
  %301 = vmatprep.subr.mxu0 0.0
  %302 = vmatpush1.msra.mxu0 0.0
  %303 = vmatprep.subr.mxu0 0.0
  %304 = vmatpush1.msra.mxu0 0.0
  %305 = vmatprep.subr.mxu0 0.0
  %306 = vmatpush1.msra.mxu0 0.0
  %307 = vmatprep.subr.mxu0 0.0
  %308 = vmatpush1.msra.mxu0 0.0
  %309 = vmatprep.subr.mxu0 0.0
  %310 = vmatpush1.msra.mxu0 0.0
  %311 = vmatprep.subr.mxu0 0.0
  %312 = vmatpush1.msra.mxu0 0.0
  %313 = vmatprep.subr.mxu0 0.0
  %314 = vmatpush1.msra.mxu0 0.0
  %315 = vmatprep.subr.mxu0 0.0
  %316 = vmatpush1.msra.mxu0 0.0
  %317 = vmatprep.subr.mxu0 0.0
  %318 = vmatpush1.msra.mxu0 0.0
  %319 = vmatprep.subr.mxu0 0.0
  %320 = vmatpush1.msra.mxu0 0.0
  %321 = vmatprep.subr.mxu0 0.0
  %322 = vmatpush1.msra.mxu0 0.0
  %323 = vmatprep.subr.mxu0 0.0
  %324 = vmatpush1.msra.mxu0 0.0
  %325 = vmatprep.subr.mxu0 0.0
  %326 = vmatpush1.msra.mxu0 0.0
  %327 = vmatprep.subr.mxu0 0.0
  %328 = vmatpush1.msra.mxu0 0.0
  %329 = vmatprep.subr.mxu0 0.0
  %330 = vmatpush1.msra.mxu0 0.0
  %331 = vmatprep.subr.mxu0 0.0
  %332 = vmatpush1.msra.mxu0 0.0
  %333 = vmatprep.subr.mxu0 0.0
  %334 = vmatpush1.msra.mxu0 0.0
  %335 = vmatprep.subr.mxu0 0.0
  %336 = vmatpush1.msra.mxu0 0.0
  %337 = vmatprep.subr.mxu0 0.0
  %338 = vmatpush1.msra.mxu0 0.0
  %339 = vmatprep.subr.mxu0 0.0
  %340 = vmatpush1.msra.mxu0 0.0
  %341 = vmatprep.subr.mxu0 0.0
  %342 = vmatpush1.msra.mxu0 0.0
  %343 = vmatprep.subr.mxu0 0.0
  %344 = vmatpush1.msra.mxu0 0.0
  %345 = vmatprep.subr.mxu0 0.0
  %346 = vmatpush1.msra.mxu0 0.0
  %347 = vmatprep.subr.mxu0 0.0
  %348 = vmatpush1.msra.mxu0 0.0
  %349 = vmatprep.subr.mxu0 0.0
  %350 = vmatpush1.msra.mxu0 0.0
  %351 = vmatprep.subr.mxu0 0.0
  %352 = vmatpush1.msra.mxu0 0.0
  %353 = vmatprep.subr.mxu0 0.0
  %354 = vmatpush1.msra.mxu0 0.0
  %355 = vmatprep.mubr.f32.mxu0 0.0
  %356 = vmatmul.mubr.f32.gmra.mrb[0].mxu0 %v289
  %v357 = vpop.f32.mrb[0].mxu0
  %v358 = vadd.f32 0.0, %v357
  %v359 = vpop.f32.mrb[0].mxu0
  %360 = vdwg.mxu0
  %v361 = vrcp.pop %v358
  %v362 = vmul.f32 %v287, %v361
  %363 = vst.msk [vmem:[%s6] sm:$0xff] %vm129, %v362
  // Predicated region
  $region26: #{mymodel_forward.1} parent=0 // pred_check
    _
  $region27: #{mymodel_forward.1} parent=0 // pred_check_branch
    %365 = sbr.rel (0) target = $region29
  $region28: #{mymodel_forward.1} parent=0 // pred_region
    _
  $region29: #{mymodel_forward.1} parent=0 // pred_fallthru
    _
  // Predicated region
  $region30: #{mymodel_forward.1} parent=0 // pred_check
    _
  $region31: #{mymodel_forward.1} parent=0 // pred_check_branch
    %367 = sbr.rel (0) target = $region33
  $region32: #{mymodel_forward.1} parent=0 // pred_region
    _
  $region33: #{mymodel_forward.1} parent=0 // pred_fallthru
    _
  // Predicated region
  $region34: #{mymodel_forward.1} parent=0 // pred_check
    _
  $region35: #{mymodel_forward.1} parent=0 // pred_check_branch
    %369 = sbr.rel (0) target = $region37
  $region36: #{mymodel_forward.1} parent=0 // pred_region
    _
  $region37: #{mymodel_forward.1} parent=0 // pred_fallthru
    _
  // Predicated region
  $region38: #{mymodel_forward.1} parent=0 // pred_check
    _
  $region39: #{mymodel_forward.1} parent=0 // pred_check_branch
    %371 = sbr.rel (0) target = $region41
  $region40: #{mymodel_forward.1} parent=0 // pred_region
    _
  $region41: #{mymodel_forward.1} parent=0 // pred_fallthru
    _
  // Predicated region
  $region42: #{mymodel_forward.1} parent=0 // pred_check
    _
  $region43: #{mymodel_forward.1} parent=0 // pred_check_branch
    %373 = sbr.rel (0) target = $region45
  $region44: #{mymodel_forward.1} parent=0 // pred_region
    _
  $region45: #{mymodel_forward.1} parent=0 // pred_fallthru
    _
  // Predicated region
  $region46: #{mymodel_forward.1} parent=0 // pred_check
    _
  $region47: #{mymodel_forward.1} parent=0 // pred_check_branch
    %375 = sbr.rel (0) target = $region49
  $region48: #{mymodel_forward.1} parent=0 // pred_region
    _
  $region49: #{mymodel_forward.1} parent=0 // pred_fallthru
    _

</llo_original>
